<compile_context>
chip_gen: v7x
topology: tpu7x:2x2x1
jax: 0.10.0
libtpu: 0.0.40
codegen_flags: <defaults>
</compile_context>

<pallas_src>
import functools

import jax
import jax.numpy as jnp
from jax.experimental import pallas as pl
from jax.experimental.pallas import tpu as pltpu


def _round_up(x: int, m: int) -> int:
    return ((x + m - 1) // m) * m


def _fused_mlp_kernel(*refs, num_layers: int):
    # refs = (x_ref, w0, b0, w1, b1, ..., w{L-1}, b{L-1}, o_ref)
    x_ref = refs[0]
    o_ref = refs[-1]
    h = x_ref[...]                                   # (tm, D0p), input dtype
    for i in range(num_layers):
        w_ref = refs[1 + 2 * i]                      # (Din_p, Dout_p), compute dtype
        b_ref = refs[2 + 2 * i]                      # (1, Dout_p), f32
        y = jnp.dot(h.astype(w_ref.dtype), w_ref[...],
                    preferred_element_type=jnp.float32)   # MXU, f32 accumulate
        y = y + b_ref[...]                           # f32 epilogue (safe on v5e too)
        if i < num_layers - 1:
            y = jnp.maximum(y, 0.0)
        h = y                                        # stays on-chip; never hits HBM
    o_ref[...] = h.astype(o_ref.dtype)


def pallas_mlp_forward(x, weights_t, biases, out_dim, *, tm: int = 256):
    """Fused MLP forward.

    x:          (..., input_dim)
    weights_t:  list of pre-transposed, 128-padded weights, shape (Din_p, Dout_p)
    biases:     list of 128-padded f32 biases, shape (1, Dout_p)
    out_dim:    true (unpadded) output feature dim
    """
    num_layers = len(weights_t)
    lead = x.shape[:-1]
    din = x.shape[-1]
    d0p = weights_t[0].shape[0]
    dLp = weights_t[-1].shape[1]

    xf = x.reshape(-1, din)
    M = xf.shape[0]

    # Row tile: multiple of 8; prefer >=2 blocks so the "parallel" axis can be
    # split across TensorCores (v7x has 2 TCs/chip) and the pipeline overlaps.
    tm_eff = min(tm, _round_up(M, 8))
    if _round_up(M, tm_eff) // tm_eff < 2 and tm_eff >= 16:
        tm_eff //= 2
    Mp = _round_up(M, tm_eff)

    # Pad rows and input features (zero-padded columns hit zero-padded weight
    # rows, so they contribute nothing).
    xf = jnp.pad(xf, ((0, Mp - M), (0, d0p - din)))

    in_specs = [pl.BlockSpec((tm_eff, d0p), lambda i: (i, 0))]
    args = [xf]
    for w_t, b in zip(weights_t, biases):
        in_specs.append(pl.BlockSpec(w_t.shape, lambda i: (0, 0)))  # resident weight
        in_specs.append(pl.BlockSpec(b.shape, lambda i: (0, 0)))    # resident bias
        args.append(w_t)
        args.append(b)

    # Explicit VMEM budget: 2x for double buffering of every operand + margin.
    param_bytes = sum(int(a.size) * a.dtype.itemsize for a in args[1:])
    tile_bytes = tm_eff * d0p * xf.dtype.itemsize + tm_eff * dLp * 4
    needed = 2 * (param_bytes + tile_bytes) + (4 << 20)
    if needed > (96 << 20):
        # TODO(synk): K/N-tile very wide layers with a scratch accumulator.
        raise ValueError("MLP layer widths too large for resident-weight fused kernel")
    vmem_limit = int(min(100 << 20, max(32 << 20, needed)))

    out = pl.pallas_call(
        functools.partial(_fused_mlp_kernel, num_layers=num_layers),
        out_shape=jax.ShapeDtypeStruct((Mp, dLp), x.dtype),
        grid_spec=pltpu.PrefetchScalarGridSpec(
            num_scalar_prefetch=0,
            grid=(Mp // tm_eff,),
            in_specs=in_specs,
            out_specs=pl.BlockSpec((tm_eff, dLp), lambda i: (i, 0)),
        ),
        compiler_params=pltpu.CompilerParams(
            dimension_semantics=("parallel",),
            vmem_limit_bytes=vmem_limit,
        ),
    )(*args)

    out = out[:M, :out_dim]
    return out.reshape(*lead, out_dim)


class PallasMLP:
    """JAX/Pallas equivalent of the PyTorch MLP module (fused forward)."""

    def __init__(self, input_dim, hidden_dim, output_dim, num_layers, key,
                 compute_dtype=jnp.float32):
        self.num_layers = num_layers
        self.output_dim = output_dim
        h = [hidden_dim] * (num_layers - 1)
        dims = list(zip([input_dim] + h, h + [output_dim]))

        self.raw_params = []   # PyTorch-layout (out, in) f32 weights, for reference
        self.weights_t = []    # padded, pre-transposed, compute-dtype (done ONCE)
        self.biases = []       # padded (1, out_p) f32

        for (n_in, n_out) in dims:
            key, wkey = jax.random.split(key)
            # trunc_normal_(std=0.02)
            w = 0.02 * jax.random.truncated_normal(
                wkey, -2.0, 2.0, (n_out, n_in), dtype=jnp.float32)
            b = jnp.zeros((n_out,), dtype=jnp.float32)
            self.raw_params.append((w, b))

            n_in_p = _round_up(n_in, 128)
            n_out_p = _round_up(n_out, 128)
            w_t = jnp.zeros((n_in_p, n_out_p), dtype=jnp.float32)
            w_t = w_t.at[:n_in, :n_out].set(w.T)
            self.weights_t.append(w_t.astype(compute_dtype))

            b_p = jnp.zeros((1, n_out_p), dtype=jnp.float32)
            b_p = b_p.at[0, :n_out].set(b)
            self.biases.append(b_p)

    def __call__(self, x):
        return pallas_mlp_forward(x, self.weights_t, self.biases, self.output_dim)


if __name__ == "__main__":
    key = jax.random.PRNGKey(0)
    key, xkey = jax.random.split(key)

    # Small shapes consistent with the module: (batch, seq, input_dim)
    batch, seq = 2, 16
    input_dim, hidden_dim, output_dim, num_layers = 4, 32, 4, 3

    x = jax.random.normal(xkey, (batch, seq, input_dim), dtype=jnp.float32)

    # f32 compute path (bit-tight vs. the pure-JAX reference)
    mlp = PallasMLP(input_dim, hidden_dim, output_dim, num_layers, key)
    out = jax.block_until_ready(mlp(x))

    # Pure-JAX reference
    ref = x.reshape(-1, input_dim)
    for i, (w, b) in enumerate(mlp.raw_params):
        ref = ref @ w.T + b
        if i < num_layers - 1:
            ref = jnp.maximum(ref, 0.0)
    ref = ref.reshape(batch, seq, output_dim)

    assert out.shape == (batch, seq, output_dim)
    assert jnp.allclose(out, ref, atol=1e-5, rtol=1e-5)

    # bf16-MXU path (same weights; f32 accumulate + f32 bias/ReLU), looser tol.
    mlp_bf16 = PallasMLP(input_dim, hidden_dim, output_dim, num_layers, key,
                         compute_dtype=jnp.bfloat16)
    out_bf16 = jax.block_until_ready(mlp_bf16(x))
    assert out_bf16.shape == (batch, seq, output_dim)
    assert jnp.allclose(out_bf16, ref, atol=3e-2, rtol=3e-2)

    print("KERNEL_OK")
</pallas_src>

<mosaic_0001>
module attributes {stable_mosaic.version = 11 : i64} {
  func.func @_fused_mlp_kernel(%arg0: i32, %arg1: memref<16x128xf32, #tpu.memory_space<vmem>>, %arg2: memref<128x128xf32, #tpu.memory_space<vmem>>, %arg3: memref<1x128xf32, #tpu.memory_space<vmem>>, %arg4: memref<128x128xf32, #tpu.memory_space<vmem>>, %arg5: memref<1x128xf32, #tpu.memory_space<vmem>>, %arg6: memref<128x128xf32, #tpu.memory_space<vmem>>, %arg7: memref<1x128xf32, #tpu.memory_space<vmem>>, %arg8: memref<16x128xf32, #tpu.memory_space<vmem>>) attributes {dimension_semantics = [#tpu.dimension_semantics<parallel>], iteration_bounds = array<i64: 2>, scalar_prefetch = 0 : i64, scratch_operands = 0 : i64, tpu.core_type = #tpu.core_type<tc>, window_params = [{transform_indices = @transform_0, window_bounds = array<i64: 16, 128>}, {pipeline_mode = #tpu.pipeline_mode<synchronous>, transform_indices = @transform_1, window_bounds = array<i64: 128, 128>}, {pipeline_mode = #tpu.pipeline_mode<synchronous>, transform_indices = @transform_2, window_bounds = array<i64: 1, 128>}, {pipeline_mode = #tpu.pipeline_mode<synchronous>, transform_indices = @transform_3, window_bounds = array<i64: 128, 128>}, {pipeline_mode = #tpu.pipeline_mode<synchronous>, transform_indices = @transform_4, window_bounds = array<i64: 1, 128>}, {pipeline_mode = #tpu.pipeline_mode<synchronous>, transform_indices = @transform_5, window_bounds = array<i64: 128, 128>}, {pipeline_mode = #tpu.pipeline_mode<synchronous>, transform_indices = @transform_6, window_bounds = array<i64: 1, 128>}, {transform_indices = @transform_7, window_bounds = array<i64: 16, 128>}]} {
    %c0 = arith.constant 0 : index
    %c0_0 = arith.constant 0 : index
    %0 = vector.load %arg1[%c0, %c0_0] : memref<16x128xf32, #tpu.memory_space<vmem>>, vector<16x128xf32>
    %c0_1 = arith.constant 0 : index
    %c0_2 = arith.constant 0 : index
    %1 = vector.load %arg2[%c0_1, %c0_2] : memref<128x128xf32, #tpu.memory_space<vmem>>, vector<128x128xf32>
    %cst = arith.constant dense<0.000000e+00> : vector<16x128xf32>
    %2 = tpu.matmul %0, %1, %cst {dimension_numbers = #tpu.dot_dimension_numbers<[1], [0], [0], [1], [0, 0, 1, 1], [], []>} : vector<16x128xf32>, vector<128x128xf32>, vector<16x128xf32> -> vector<16x128xf32>
    %c0_3 = arith.constant 0 : index
    %c0_4 = arith.constant 0 : index
    %3 = vector.load %arg3[%c0_3, %c0_4] : memref<1x128xf32, #tpu.memory_space<vmem>>, vector<1x128xf32>
    %4 = vector.broadcast %3 : vector<1x128xf32> to vector<16x128xf32>
    %5 = arith.addf %2, %4 : vector<16x128xf32>
    %cst_5 = arith.constant 0.000000e+00 : f32
    %6 = vector.broadcast %cst_5 : f32 to vector<16x128xf32>
    %7 = arith.maximumf %5, %6 : vector<16x128xf32>
    %c0_6 = arith.constant 0 : index
    %c0_7 = arith.constant 0 : index
    %8 = vector.load %arg4[%c0_6, %c0_7] : memref<128x128xf32, #tpu.memory_space<vmem>>, vector<128x128xf32>
    %cst_8 = arith.constant dense<0.000000e+00> : vector<16x128xf32>
    %9 = tpu.matmul %7, %8, %cst_8 {dimension_numbers = #tpu.dot_dimension_numbers<[1], [0], [0], [1], [0, 0, 1, 1], [], []>} : vector<16x128xf32>, vector<128x128xf32>, vector<16x128xf32> -> vector<16x128xf32>
    %c0_9 = arith.constant 0 : index
    %c0_10 = arith.constant 0 : index
    %10 = vector.load %arg5[%c0_9, %c0_10] : memref<1x128xf32, #tpu.memory_space<vmem>>, vector<1x128xf32>
    %11 = vector.broadcast %10 : vector<1x128xf32> to vector<16x128xf32>
    %12 = arith.addf %9, %11 : vector<16x128xf32>
    %cst_11 = arith.constant 0.000000e+00 : f32
    %13 = vector.broadcast %cst_11 : f32 to vector<16x128xf32>
    %14 = arith.maximumf %12, %13 : vector<16x128xf32>
    %c0_12 = arith.constant 0 : index
    %c0_13 = arith.constant 0 : index
    %15 = vector.load %arg6[%c0_12, %c0_13] : memref<128x128xf32, #tpu.memory_space<vmem>>, vector<128x128xf32>
    %cst_14 = arith.constant dense<0.000000e+00> : vector<16x128xf32>
    %16 = tpu.matmul %14, %15, %cst_14 {dimension_numbers = #tpu.dot_dimension_numbers<[1], [0], [0], [1], [0, 0, 1, 1], [], []>} : vector<16x128xf32>, vector<128x128xf32>, vector<16x128xf32> -> vector<16x128xf32>
    %c0_15 = arith.constant 0 : index
    %c0_16 = arith.constant 0 : index
    %17 = vector.load %arg7[%c0_15, %c0_16] : memref<1x128xf32, #tpu.memory_space<vmem>>, vector<1x128xf32>
    %18 = vector.broadcast %17 : vector<1x128xf32> to vector<16x128xf32>
    %19 = arith.addf %16, %18 : vector<16x128xf32>
    %c0_17 = arith.constant 0 : index
    %c0_18 = arith.constant 0 : index
    %20 = vector.load %arg8[%c0_17, %c0_18] : memref<16x128xf32, #tpu.memory_space<vmem>>, vector<16x128xf32>
    tpu.vector_store %arg8[%c0_17, %c0_18], %19 {strides = array<i32>} : memref<16x128xf32, #tpu.memory_space<vmem>>, vector<16x128xf32>,
    return
  }
  func.func @transform_0(%arg0: i32) -> (i32, i32) {
    %c0_i32 = arith.constant 0 : i32
    %c0_i32_0 = arith.constant 0 : i32
    return %arg0, %c0_i32 : i32, i32
  }
  func.func @transform_1(%arg0: i32) -> (i32, i32) {
    %c0_i32 = arith.constant 0 : i32
    %c0_i32_0 = arith.constant 0 : i32
    %c0_i32_1 = arith.constant 0 : i32
    return %c0_i32, %c0_i32_0 : i32, i32
  }
  func.func @transform_2(%arg0: i32) -> (i32, i32) {
    %c0_i32 = arith.constant 0 : i32
    %c0_i32_0 = arith.constant 0 : i32
    %c0_i32_1 = arith.constant 0 : i32
    return %c0_i32, %c0_i32_0 : i32, i32
  }
  func.func @transform_3(%arg0: i32) -> (i32, i32) {
    %c0_i32 = arith.constant 0 : i32
    %c0_i32_0 = arith.constant 0 : i32
    %c0_i32_1 = arith.constant 0 : i32
    return %c0_i32, %c0_i32_0 : i32, i32
  }
  func.func @transform_4(%arg0: i32) -> (i32, i32) {
    %c0_i32 = arith.constant 0 : i32
    %c0_i32_0 = arith.constant 0 : i32
    %c0_i32_1 = arith.constant 0 : i32
    return %c0_i32, %c0_i32_0 : i32, i32
  }
  func.func @transform_5(%arg0: i32) -> (i32, i32) {
    %c0_i32 = arith.constant 0 : i32
    %c0_i32_0 = arith.constant 0 : i32
    %c0_i32_1 = arith.constant 0 : i32
    return %c0_i32, %c0_i32_0 : i32, i32
  }
  func.func @transform_6(%arg0: i32) -> (i32, i32) {
    %c0_i32 = arith.constant 0 : i32
    %c0_i32_0 = arith.constant 0 : i32
    %c0_i32_1 = arith.constant 0 : i32
    return %c0_i32, %c0_i32_0 : i32, i32
  }
  func.func @transform_7(%arg0: i32) -> (i32, i32) {
    %c0_i32 = arith.constant 0 : i32
    %c0_i32_0 = arith.constant 0 : i32
    return %arg0, %c0_i32 : i32, i32
  }
}

</mosaic_0001>

<llo_original>
// kernel: tpu_custom_call.1
$region0: #{tpu_custom_call.1}
  #allocation0 [shape = 'u32[]', space=smem, size = 0x4, offset = 0x4, fixed_abs, tag = 'smem constant byte address 0x4 - core index']
  #allocation1 [shape = 'u32[144,128]{1,0:T(1,128)}', space=vmem, size = 0x12000, scoped, tag = 'internal scratch']
  %s0 = inlined_call_operand.hbm [shape: f32[32,128], index: 0, kind: input, shape index: {}]
  %s1 = inlined_call_operand.hbm [shape: f32[128,128], index: 1, kind: input, shape index: {}]
  %s2 = inlined_call_operand.vmem [shape: f32[1,128], index: 2, kind: input, shape index: {}]
  %s3 = inlined_call_operand.hbm [shape: f32[128,128], index: 3, kind: input, shape index: {}]
  %s4 = inlined_call_operand.vmem [shape: f32[1,128], index: 4, kind: input, shape index: {}]
  %s5 = inlined_call_operand.hbm [shape: f32[128,128], index: 5, kind: input, shape index: {}]
  %s6 = inlined_call_operand.vmem [shape: f32[1,128], index: 6, kind: input, shape index: {}]
  %s7 = inlined_call_operand.hbm [shape: f32[32,128], index: 7, kind: output, shape index: {}]
  %s8 = sld [smem:[#allocation0]]
  $region77: #{tpu_custom_call.1} parent=0
    _
  %s10 = ssub.s32 1, %s8
  %s11 = scalar_select 0, %s10, %s8
  $region1: #{tpu_custom_call.1} parent=0
    #allocation2 [shape = 'u8[16384]{0}', space=vmem, size = 0x4000, scoped, tag = 'input window, operand 0']
    #allocation3 [shape = 's32[2]{0}', space=sflag, size = 0x8, scoped, tag = 'scoped memory for tpu_custom_call.1']
    #allocation4 [shape = 's32[2]{0}', space=sflag, size = 0x8, scoped, tag = 'scoped memory for tpu_custom_call.1']
    #allocation5 [shape = 'u8[65536]{0}', space=vmem, size = 0x10000, scoped, tag = 'input window, operand 1, single buffered']
    #allocation6 [shape = 's32[1]{0}', space=sflag, size = 0x4, scoped, tag = 'scoped memory for tpu_custom_call.1']
    #allocation7 [shape = 'u8[65536]{0}', space=vmem, size = 0x10000, scoped, tag = 'input window, operand 3, single buffered']
    #allocation8 [shape = 'u8[65536]{0}', space=vmem, size = 0x10000, scoped, tag = 'input window, operand 5, single buffered']
    #allocation9 [shape = 's32[1]{0}', space=sflag, size = 0x4, scoped, tag = 'scoped memory for tpu_custom_call.1']
    #allocation10 [shape = 'u8[16384]{0}', space=vmem, size = 0x4000, scoped, tag = 'output window, operand 0']
    %12 = vsyncpa [#allocation3], 0
    %s13 = scalar_lea.sflag [#allocation3], 1
    %14 = vsyncpa %s13, 0
    %15 = vsyncpa [#allocation6], 0
    %16 = vsyncpa [#allocation9], 0
    %17 = vsyncpa [#allocation4], 0
    %s18 = scalar_lea.sflag [#allocation4], 1
    %19 = vsyncpa %s18, 0
    loop: start=0, step=1, limit=4
    $region2: #{tpu_custom_call.1} parent=1 // loop_pre_header
      _
    $region3: #{tpu_custom_call.1} parent=1 // loop_header
      %s21 = sphi 0, %s25
      %p22 = scmp.ge.s32.totalorder %s21, 4
      %s31 = sphi 0, %s33
      %s34 = sphi 0, %s31
      %s35 = sphi 0, %s34
      %s51 = sphi 0, %s35
      %s55 = sphi 0, %s55
      %s57 = sphi 0, %s55
      %s58 = sphi 0, %s57
      %s72 = sphi 0, %s58
      %s76 = sphi 0, %s76
      %s78 = sphi 0, %s76
      %s79 = sphi 0, %s78
      %s93 = sphi 0, %s79
      %s97 = sphi 0, %s97
      %s99 = sphi 0, %s97
      %s100 = sphi 0, %s99
      %s114 = sphi 0, %s100
      %s118 = sphi 0, %s118
      %s120 = sphi 0, %s118
      %s121 = sphi 0, %s120
      %s135 = sphi 0, %s121
      %s139 = sphi 0, %s139
      %s141 = sphi 0, %s139
      %s142 = sphi 0, %s141
      %s156 = sphi 0, %s142
      %s160 = sphi 0, %s160
      %s162 = sphi 0, %s160
      %s163 = sphi 0, %s162
      %s177 = sphi 0, %s163
      %s183 = sphi 0, %s185
      %s186 = sphi 0, %s183
      %s187 = sphi 0, %s186
      %s203 = sphi 0, %s187
    $region4: #{tpu_custom_call.1} parent=1 // loop_header_branch
      %24 = sbr.rel (%p22) target = $region8
    $region5: #{tpu_custom_call.1} parent=1 // loop_body
      %s26 = ssub.s32 %s21, 1
      %s27 = ssub.s32 %s21, 2
      %s28 = sadd.s32 %s21, 1
      %s29 = ssub.s32 %s21, %s28
      %p30 = scmp.eq.s32.totalorder %s29, 0
      %s32 = sadd.s32 %s31, 1
      %s33 = scalar_select %p30, %s31, %s32
      %p36 = pneg %p30
      %p37 = scmp.eq.s32.totalorder %s21, 1
      %p38 = por %p36, %p37
      %p39 = scmp.ne.s32.totalorder %s31, %s34
      %p40 = scmp.eq.s32.totalorder %s21, 0
      %p41 = por %p39, %p40
      %p42 = scmp.ne.s32.totalorder %s31, %s34
      %p43 = scmp.eq.s32.totalorder %s26, 1
      %p44 = por %p42, %p43
      %p45 = scmp.ne.s32.totalorder %s34, %s35
      %p46 = scmp.eq.s32.totalorder %s26, 0
      %p47 = por %p45, %p46
      %p48 = scmp.ne.s32.totalorder %s34, %s35
      %p49 = scmp.eq.s32.totalorder %s27, 1
      %p50 = por %p48, %p49
      %p52 = scmp.ne.s32.totalorder %s35, %s51
      %p53 = scmp.eq.s32.totalorder %s27, 0
      %p54 = por %p52, %p53
      %s56 = sadd.s32 %s55, 1
      %p59 = scmp.eq.s32.totalorder %s21, 1
      %p60 = scmp.ne.s32.totalorder %s55, %s57
      %p61 = scmp.eq.s32.totalorder %s21, 0
      %p62 = por %p60, %p61
      %p63 = scmp.ne.s32.totalorder %s55, %s57
      %p64 = scmp.eq.s32.totalorder %s26, 1
      %p65 = por %p63, %p64
      %p66 = scmp.ne.s32.totalorder %s57, %s58
      %p67 = scmp.eq.s32.totalorder %s26, 0
      %p68 = por %p66, %p67
      %p69 = scmp.ne.s32.totalorder %s57, %s58
      %p70 = scmp.eq.s32.totalorder %s27, 1
      %p71 = por %p69, %p70
      %p73 = scmp.ne.s32.totalorder %s58, %s72
      %p74 = scmp.eq.s32.totalorder %s27, 0
      %p75 = por %p73, %p74
      %s77 = sadd.s32 %s76, 1
      %p80 = scmp.eq.s32.totalorder %s21, 1
      %p81 = scmp.ne.s32.totalorder %s76, %s78
      %p82 = scmp.eq.s32.totalorder %s21, 0
      %p83 = por %p81, %p82
      %p84 = scmp.ne.s32.totalorder %s76, %s78
      %p85 = scmp.eq.s32.totalorder %s26, 1
      %p86 = por %p84, %p85
      %p87 = scmp.ne.s32.totalorder %s78, %s79
      %p88 = scmp.eq.s32.totalorder %s26, 0
      %p89 = por %p87, %p88
      %p90 = scmp.ne.s32.totalorder %s78, %s79
      %p91 = scmp.eq.s32.totalorder %s27, 1
      %p92 = por %p90, %p91
      %p94 = scmp.ne.s32.totalorder %s79, %s93
      %p95 = scmp.eq.s32.totalorder %s27, 0
      %p96 = por %p94, %p95
      %s98 = sadd.s32 %s97, 1
      %p101 = scmp.eq.s32.totalorder %s21, 1
      %p102 = scmp.ne.s32.totalorder %s97, %s99
      %p103 = scmp.eq.s32.totalorder %s21, 0
      %p104 = por %p102, %p103
      %p105 = scmp.ne.s32.totalorder %s97, %s99
      %p106 = scmp.eq.s32.totalorder %s26, 1
      %p107 = por %p105, %p106
      %p108 = scmp.ne.s32.totalorder %s99, %s100
      %p109 = scmp.eq.s32.totalorder %s26, 0
      %p110 = por %p108, %p109
      %p111 = scmp.ne.s32.totalorder %s99, %s100
      %p112 = scmp.eq.s32.totalorder %s27, 1
      %p113 = por %p111, %p112
      %p115 = scmp.ne.s32.totalorder %s100, %s114
      %p116 = scmp.eq.s32.totalorder %s27, 0
      %p117 = por %p115, %p116
      %s119 = sadd.s32 %s118, 1
      %p122 = scmp.eq.s32.totalorder %s21, 1
      %p123 = scmp.ne.s32.totalorder %s118, %s120
      %p124 = scmp.eq.s32.totalorder %s21, 0
      %p125 = por %p123, %p124
      %p126 = scmp.ne.s32.totalorder %s118, %s120
      %p127 = scmp.eq.s32.totalorder %s26, 1
      %p128 = por %p126, %p127
      %p129 = scmp.ne.s32.totalorder %s120, %s121
      %p130 = scmp.eq.s32.totalorder %s26, 0
      %p131 = por %p129, %p130
      %p132 = scmp.ne.s32.totalorder %s120, %s121
      %p133 = scmp.eq.s32.totalorder %s27, 1
      %p134 = por %p132, %p133
      %p136 = scmp.ne.s32.totalorder %s121, %s135
      %p137 = scmp.eq.s32.totalorder %s27, 0
      %p138 = por %p136, %p137
      %s140 = sadd.s32 %s139, 1
      %p143 = scmp.eq.s32.totalorder %s21, 1
      %p144 = scmp.ne.s32.totalorder %s139, %s141
      %p145 = scmp.eq.s32.totalorder %s21, 0
      %p146 = por %p144, %p145
      %p147 = scmp.ne.s32.totalorder %s139, %s141
      %p148 = scmp.eq.s32.totalorder %s26, 1
      %p149 = por %p147, %p148
      %p150 = scmp.ne.s32.totalorder %s141, %s142
      %p151 = scmp.eq.s32.totalorder %s26, 0
      %p152 = por %p150, %p151
      %p153 = scmp.ne.s32.totalorder %s141, %s142
      %p154 = scmp.eq.s32.totalorder %s27, 1
      %p155 = por %p153, %p154
      %p157 = scmp.ne.s32.totalorder %s142, %s156
      %p158 = scmp.eq.s32.totalorder %s27, 0
      %p159 = por %p157, %p158
      %s161 = sadd.s32 %s160, 1
      %p164 = scmp.eq.s32.totalorder %s21, 1
      %p165 = scmp.ne.s32.totalorder %s160, %s162
      %p166 = scmp.eq.s32.totalorder %s21, 0
      %p167 = por %p165, %p166
      %p168 = scmp.ne.s32.totalorder %s160, %s162
      %p169 = scmp.eq.s32.totalorder %s26, 1
      %p170 = por %p168, %p169
      %p171 = scmp.ne.s32.totalorder %s162, %s163
      %p172 = scmp.eq.s32.totalorder %s26, 0
      %p173 = por %p171, %p172
      %p174 = scmp.ne.s32.totalorder %s162, %s163
      %p175 = scmp.eq.s32.totalorder %s27, 1
      %p176 = por %p174, %p175
      %p178 = scmp.ne.s32.totalorder %s163, %s177
      %p179 = scmp.eq.s32.totalorder %s27, 0
      %p180 = por %p178, %p179
      %s181 = ssub.s32 %s21, %s28
      %p182 = scmp.eq.s32.totalorder %s181, 0
      %s184 = sadd.s32 %s183, 1
      %s185 = scalar_select %p182, %s183, %s184
      %p188 = pneg %p182
      %p189 = scmp.eq.s32.totalorder %s21, 1
      %p190 = por %p188, %p189
      %p191 = scmp.ne.s32.totalorder %s183, %s186
      %p192 = scmp.eq.s32.totalorder %s21, 0
      %p193 = por %p191, %p192
      %p194 = scmp.ne.s32.totalorder %s183, %s186
      %p195 = scmp.eq.s32.totalorder %s26, 1
      %p196 = por %p194, %p195
      %p197 = scmp.ne.s32.totalorder %s186, %s187
      %p198 = scmp.eq.s32.totalorder %s26, 0
      %p199 = por %p197, %p198
      %p200 = scmp.ne.s32.totalorder %s186, %s187
      %p201 = scmp.eq.s32.totalorder %s27, 1
      %p202 = por %p200, %p201
      %p204 = scmp.ne.s32.totalorder %s187, %s203
      %p205 = scmp.eq.s32.totalorder %s27, 0
      %p206 = por %p204, %p205
      %p207 = scmp.le.s32.totalorder 1, %s21
      %p208 = scmp.lt.s32.totalorder %s21, 3
      %p209 = pnand %p207, %p208
      %p210 = pneg %p209
      // Predicated region
      $region9: #{tpu_custom_call.1} parent=5 // pred_check
        _
      $region10: #{tpu_custom_call.1} parent=5 // pred_check_branch
        %212 = sbr.rel (%p209) target = $region12
      $region11: #{tpu_custom_call.1} parent=5 // pred_region
        %s213 = ssub.s32 %s21, 1
        // Predicated region
        $region13: #{tpu_custom_call.1} parent=11 // pred_check
          %p214 = pneg %p68
        $region14: #{tpu_custom_call.1} parent=11 // pred_check_branch
          %216 = sbr.rel (%p214) target = $region16
        $region15: #{tpu_custom_call.1} parent=11 // pred_region
          %s218 = ssub.s32 2048, 2048
          %219 = vsyncadd [#allocation6], %s218
          %s220 = sshll.u32 [#allocation5], 4
          %s221 = int_to_ptr.vmem [resolvable:$true] %s220
          %226 = dma.hbm_to_vmem [thread:$0]  %s1, 2048, %s221, [#allocation6], 128, 128, 8
        $region16: #{tpu_custom_call.1} parent=11 // pred_fallthru
          _
        // Predicated region
        $region17: #{tpu_custom_call.1} parent=11 // pred_check
          %p227 = pneg %p89
        $region18: #{tpu_custom_call.1} parent=11 // pred_check_branch
          %229 = sbr.rel (%p227) target = $region20
        $region19: #{tpu_custom_call.1} parent=11 // pred_region
          _
        $region20: #{tpu_custom_call.1} parent=11 // pred_fallthru
          _
        // Predicated region
        $region21: #{tpu_custom_call.1} parent=11 // pred_check
          %p230 = pneg %p110
        $region22: #{tpu_custom_call.1} parent=11 // pred_check_branch
          %232 = sbr.rel (%p230) target = $region24
        $region23: #{tpu_custom_call.1} parent=11 // pred_region
          %s234 = ssub.s32 2048, 2048
          %235 = vsyncadd [#allocation6], %s234
          %s236 = sshll.u32 [#allocation7], 4
          %s237 = int_to_ptr.vmem [resolvable:$true] %s236
          %242 = dma.hbm_to_vmem [thread:$0]  %s3, 2048, %s237, [#allocation6], 128, 128, 8
        $region24: #{tpu_custom_call.1} parent=11 // pred_fallthru
          _
        // Predicated region
        $region25: #{tpu_custom_call.1} parent=11 // pred_check
          %p243 = pneg %p131
        $region26: #{tpu_custom_call.1} parent=11 // pred_check_branch
          %245 = sbr.rel (%p243) target = $region28
        $region27: #{tpu_custom_call.1} parent=11 // pred_region
          _
        $region28: #{tpu_custom_call.1} parent=11 // pred_fallthru
          _
        // Predicated region
        $region29: #{tpu_custom_call.1} parent=11 // pred_check
          %p246 = pneg %p152
        $region30: #{tpu_custom_call.1} parent=11 // pred_check_branch
          %248 = sbr.rel (%p246) target = $region32
        $region31: #{tpu_custom_call.1} parent=11 // pred_region
          %s250 = ssub.s32 2048, 2048
          %251 = vsyncadd [#allocation9], %s250
          %s252 = sshll.u32 [#allocation8], 4
          %s253 = int_to_ptr.vmem [resolvable:$true] %s252
          %258 = dma.hbm_to_vmem [thread:$0]  %s5, 2048, %s253, [#allocation9], 128, 128, 8
        $region32: #{tpu_custom_call.1} parent=11 // pred_fallthru
          _
        // Predicated region
        $region33: #{tpu_custom_call.1} parent=11 // pred_check
          %p259 = pneg %p173
        $region34: #{tpu_custom_call.1} parent=11 // pred_check_branch
          %261 = sbr.rel (%p259) target = $region36
        $region35: #{tpu_custom_call.1} parent=11 // pred_region
          _
        $region36: #{tpu_custom_call.1} parent=11 // pred_fallthru
          _
      $region12: #{tpu_custom_call.1} parent=5 // pred_fallthru
        _
      %p262 = scmp.lt.s32.totalorder %s21, 2
      // Predicated region
      $region37: #{tpu_custom_call.1} parent=5 // pred_check
        %p263 = pneg %p262
      $region38: #{tpu_custom_call.1} parent=5 // pred_check_branch
        %265 = sbr.rel (%p263) target = $region40
      $region39: #{tpu_custom_call.1} parent=5 // pred_region
        // Predicated region
        $region41: #{tpu_custom_call.1} parent=39 // pred_check
          %p266 = pneg %p41
        $region42: #{tpu_custom_call.1} parent=39 // pred_check_branch
          %268 = sbr.rel (%p266) target = $region44
        $region43: #{tpu_custom_call.1} parent=39 // pred_region
          %s269 = sand.u32 %s31, 1
          %s270 = scalar_lea.sflag [#allocation3], %s269
          %s271 = sand.u32 %s31, 1
          %s272 = smul.addr %s271, 16
          %s273 = scalar_lea.vmem [#allocation2], %s272
          %s274 = smul.u32 2, %s21
          %s276 = ssub.s32 256, 256
          %277 = vsyncadd %s270, %s276
          %s278 = smul.addr %s274, 128
          %s279 = scalar_lea.hbm %s0, %s278
          %s280 = sshll.u32 %s273, 4
          %s281 = int_to_ptr.vmem [resolvable:$true] %s280
          %286 = dma.hbm_to_vmem [thread:$0]  %s279, 256, %s281, %s270, 128, 128, 8
        $region44: #{tpu_custom_call.1} parent=39 // pred_fallthru
          _
      $region40: #{tpu_custom_call.1} parent=5 // pred_fallthru
        _
      %p287 = scmp.le.s32.totalorder 1, %s21
      %p288 = scmp.lt.s32.totalorder %s21, 3
      %p289 = pnand %p287, %p288
      %p290 = pneg %p289
      // Predicated region
      $region45: #{tpu_custom_call.1} parent=5 // pred_check
        _
      $region46: #{tpu_custom_call.1} parent=5 // pred_check_branch
        %292 = sbr.rel (%p289) target = $region48
      $region47: #{tpu_custom_call.1} parent=5 // pred_region
        %s293 = ssub.s32 %s21, 1
        %s294 = sand.u32 %s34, 1
        %s295 = scalar_lea.sflag [#allocation3], %s294
        %s296 = sand.u32 %s34, 1
        %s297 = smul.addr %s296, 16
        %s298 = scalar_lea.vmem [#allocation2], %s297
        // Predicated region
        $region49: #{tpu_custom_call.1} parent=47 // pred_check
          %p299 = pneg %p47
        $region50: #{tpu_custom_call.1} parent=47 // pred_check_branch
          %301 = sbr.rel (%p299) target = $region52
        $region51: #{tpu_custom_call.1} parent=47 // pred_region
          %302 = dma.done %s295, 256
        $region52: #{tpu_custom_call.1} parent=47 // pred_fallthru
          _
        // Predicated region
        $region53: #{tpu_custom_call.1} parent=47 // pred_check
          %p303 = pneg %p68
        $region54: #{tpu_custom_call.1} parent=47 // pred_check_branch
          %305 = sbr.rel (%p303) target = $region56
        $region55: #{tpu_custom_call.1} parent=47 // pred_region
          %306 = dma.done [#allocation6], 2048
        $region56: #{tpu_custom_call.1} parent=47 // pred_fallthru
          _
        // Predicated region
        $region57: #{tpu_custom_call.1} parent=47 // pred_check
          %p307 = pneg %p110
        $region58: #{tpu_custom_call.1} parent=47 // pred_check_branch
          %309 = sbr.rel (%p307) target = $region60
        $region59: #{tpu_custom_call.1} parent=47 // pred_region
          %310 = dma.done [#allocation6], 2048
        $region60: #{tpu_custom_call.1} parent=47 // pred_fallthru
          _
        // Predicated region
        $region61: #{tpu_custom_call.1} parent=47 // pred_check
          %p311 = pneg %p152
        $region62: #{tpu_custom_call.1} parent=47 // pred_check_branch
          %313 = sbr.rel (%p311) target = $region64
        $region63: #{tpu_custom_call.1} parent=47 // pred_region
          %314 = dma.done [#allocation9], 2048
        $region64: #{tpu_custom_call.1} parent=47 // pred_fallthru
          _
        %s315 = sand.u32 %s34, 1
        %s316 = scalar_lea.sflag [#allocation3], %s315
        %s317 = sand.u32 %s34, 1
        %s318 = smul.addr %s317, 16
        %s319 = scalar_lea.vmem [#allocation2], %s318
        %p320 = pneg %p47
        %p321 = pneg %p44
        %p322 = pneg %p68
        %p323 = pneg %p65
        %p324 = pneg %p89
        %p325 = pneg %p86
        %p326 = pneg %p110
        %p327 = pneg %p107
        %p328 = pneg %p131
        %p329 = pneg %p128
        %p330 = pneg %p152
        %p331 = pneg %p149
        %p332 = pneg %p173
        %p333 = pneg %p170
        %p334 = pneg %p199
        %p335 = pneg %p196
        %s336 = sand.u32 %s186, 1
        %s337 = scalar_lea.sflag [#allocation4], %s336
        %s338 = sand.u32 %s186, 1
        %s339 = smul.addr %s338, 16
        %s340 = scalar_lea.vmem [#allocation10], %s339
        %s341 = smul.u32 2, %s26
        %s342 = smul.u32 2, %s26
        %v343 = vld [vmem:[%s298] sm:$0xff]
        %v344 = vld [vmem:[%s298 + $0x8] sm:$0xff]
        %v345 = vld [vmem:[#allocation5] sm:$0xff]
        %v346 = vld [vmem:[#allocation5 + $0x8] sm:$0xff]
        %v347 = vld [vmem:[#allocation5 + $0x10] sm:$0xff]
        %v348 = vld [vmem:[#allocation5 + $0x18] sm:$0xff]
        %v349 = vld [vmem:[#allocation5 + $0x20] sm:$0xff]
        %v350 = vld [vmem:[#allocation5 + $0x28] sm:$0xff]
        %v351 = vld [vmem:[#allocation5 + $0x30] sm:$0xff]
        %v352 = vld [vmem:[#allocation5 + $0x38] sm:$0xff]
        %v353 = vld [vmem:[#allocation5 + $0x40] sm:$0xff]
        %v354 = vld [vmem:[#allocation5 + $0x48] sm:$0xff]
        %v355 = vld [vmem:[#allocation5 + $0x50] sm:$0xff]
        %v356 = vld [vmem:[#allocation5 + $0x58] sm:$0xff]
        %v357 = vld [vmem:[#allocation5 + $0x60] sm:$0xff]
        %v358 = vld [vmem:[#allocation5 + $0x68] sm:$0xff]
        %v359 = vld [vmem:[#allocation5 + $0x70] sm:$0xff]
        %v360 = vld [vmem:[#allocation5 + $0x78] sm:$0xff]
        %v361 = vld [vmem:[%s2] sm:$0x1]
        %v363 = vlaneseq
        %v364 = vshrl.u32 %v363, 7
        %v365 = vsub.s32 0, %v364
        %v366 = vrot.slane %v361, %v365
        %368 = vmatprep.subr.mxu0 0.0
        %369 = vmatpush1.msra.mxu0 %v345
        %370 = vmatprep.subr.mxu0 0.0
        %371 = vmatpush1.msra.mxu0 %v346
        %372 = vmatprep.subr.mxu0 0.0
        %373 = vmatpush1.msra.mxu0 %v347
        %374 = vmatprep.subr.mxu0 0.0
        %375 = vmatpush1.msra.mxu0 %v348
        %376 = vmatprep.subr.mxu0 0.0
        %377 = vmatpush1.msra.mxu0 %v349
        %378 = vmatprep.subr.mxu0 0.0
        %379 = vmatpush1.msra.mxu0 %v350
        %380 = vmatprep.subr.mxu0 0.0
        %381 = vmatpush1.msra.mxu0 %v351
        %382 = vmatprep.subr.mxu0 0.0
        %383 = vmatpush1.msra.mxu0 %v352
        %384 = vmatprep.subr.mxu0 0.0
        %385 = vmatpush1.msra.mxu0 %v353
        %386 = vmatprep.subr.mxu0 0.0
        %387 = vmatpush1.msra.mxu0 %v354
        %388 = vmatprep.subr.mxu0 0.0
        %389 = vmatpush1.msra.mxu0 %v355
        %390 = vmatprep.subr.mxu0 0.0
        %391 = vmatpush1.msra.mxu0 %v356
        %392 = vmatprep.subr.mxu0 0.0
        %393 = vmatpush1.msra.mxu0 %v357
        %394 = vmatprep.subr.mxu0 0.0
        %395 = vmatpush1.msra.mxu0 %v358
        %396 = vmatprep.subr.mxu0 0.0
        %397 = vmatpush1.msra.mxu0 %v359
        %398 = vmatprep.subr.mxu0 0.0
        %399 = vmatpush1.msra.mxu0 %v360
        %400 = vmatprep.subr.mxu0 0.0
        %401 = vmatpush1.msra.mxu0 0.0
        %402 = vmatprep.subr.mxu0 0.0
        %403 = vmatpush1.msra.mxu0 0.0
        %404 = vmatprep.subr.mxu0 0.0
        %405 = vmatpush1.msra.mxu0 0.0
        %406 = vmatprep.subr.mxu0 0.0
        %407 = vmatpush1.msra.mxu0 0.0
        %408 = vmatprep.subr.mxu0 0.0
        %409 = vmatpush1.msra.mxu0 0.0
        %410 = vmatprep.subr.mxu0 0.0
        %411 = vmatpush1.msra.mxu0 0.0
        %412 = vmatprep.subr.mxu0 0.0
        %413 = vmatpush1.msra.mxu0 0.0
        %414 = vmatprep.subr.mxu0 0.0
        %415 = vmatpush1.msra.mxu0 0.0
        %416 = vmatprep.subr.mxu0 0.0
        %417 = vmatpush1.msra.mxu0 0.0
        %418 = vmatprep.subr.mxu0 0.0
        %419 = vmatpush1.msra.mxu0 0.0
        %420 = vmatprep.subr.mxu0 0.0
        %421 = vmatpush1.msra.mxu0 0.0
        %422 = vmatprep.subr.mxu0 0.0
        %423 = vmatpush1.msra.mxu0 0.0
        %424 = vmatprep.subr.mxu0 0.0
        %425 = vmatpush1.msra.mxu0 0.0
        %426 = vmatprep.subr.mxu0 0.0
        %427 = vmatpush1.msra.mxu0 0.0
        %428 = vmatprep.subr.mxu0 0.0
        %429 = vmatpush1.msra.mxu0 0.0
        %430 = vmatprep.subr.mxu0 0.0
        %431 = vmatpush1.msra.mxu0 0.0
        %432 = vmatprep.mubr.f32.mxu0 0.0
        %433 = vmatmul.mubr.f32.gmra.mrb[0].mxu0 %v343
        %v434 = vpop.f32.mrb[0].mxu0
        %v435 = vadd.f32 %v366, %v434
        %v436 = vpop.f32.mrb[0].mxu0
        %437 = vmatprep.mubr.f32.mxu0 0.0
        %438 = vmatmul.mubr.f32.gmra.mrb[0].mxu0 %v344
        %v439 = vpop.f32.mrb[0].mxu0
        %v440 = vadd.f32 %v366, %v439
        %v441 = vpop.f32.mrb[0].mxu0
        %442 = vdwg.mxu0
        %v443 = vmax.f32 %v435, 0.0
        %v444 = vmax.f32 %v440, 0.0
        %v445 = vld [vmem:[#allocation7] sm:$0xff]
        %v446 = vld [vmem:[#allocation7 + $0x8] sm:$0xff]
        %v447 = vld [vmem:[#allocation7 + $0x10] sm:$0xff]
        %v448 = vld [vmem:[#allocation7 + $0x18] sm:$0xff]
        %v449 = vld [vmem:[#allocation7 + $0x20] sm:$0xff]
        %v450 = vld [vmem:[#allocation7 + $0x28] sm:$0xff]
        %v451 = vld [vmem:[#allocation7 + $0x30] sm:$0xff]
        %v452 = vld [vmem:[#allocation7 + $0x38] sm:$0xff]
        %v453 = vld [vmem:[#allocation7 + $0x40] sm:$0xff]
        %v454 = vld [vmem:[#allocation7 + $0x48] sm:$0xff]
        %v455 = vld [vmem:[#allocation7 + $0x50] sm:$0xff]
        %v456 = vld [vmem:[#allocation7 + $0x58] sm:$0xff]
        %v457 = vld [vmem:[#allocation7 + $0x60] sm:$0xff]
        %v458 = vld [vmem:[#allocation7 + $0x68] sm:$0xff]
        %v459 = vld [vmem:[#allocation7 + $0x70] sm:$0xff]
        %v460 = vld [vmem:[#allocation7 + $0x78] sm:$0xff]
        %v461 = vld [vmem:[%s4] sm:$0x1]
        %v463 = vlaneseq
        %v464 = vshrl.u32 %v463, 7
        %v465 = vsub.s32 0, %v464
        %v466 = vrot.slane %v461, %v465
        %468 = vmatprep.subr.mxu0 0.0
        %469 = vmatpush1.msra.mxu0 %v445
        %470 = vmatprep.subr.mxu0 0.0
        %471 = vmatpush1.msra.mxu0 %v446
        %472 = vmatprep.subr.mxu0 0.0
        %473 = vmatpush1.msra.mxu0 %v447
        %474 = vmatprep.subr.mxu0 0.0
        %475 = vmatpush1.msra.mxu0 %v448
        %476 = vmatprep.subr.mxu0 0.0
        %477 = vmatpush1.msra.mxu0 %v449
        %478 = vmatprep.subr.mxu0 0.0
        %479 = vmatpush1.msra.mxu0 %v450
        %480 = vmatprep.subr.mxu0 0.0
        %481 = vmatpush1.msra.mxu0 %v451
        %482 = vmatprep.subr.mxu0 0.0
        %483 = vmatpush1.msra.mxu0 %v452
        %484 = vmatprep.subr.mxu0 0.0
        %485 = vmatpush1.msra.mxu0 %v453
        %486 = vmatprep.subr.mxu0 0.0
        %487 = vmatpush1.msra.mxu0 %v454
        %488 = vmatprep.subr.mxu0 0.0
        %489 = vmatpush1.msra.mxu0 %v455
        %490 = vmatprep.subr.mxu0 0.0
        %491 = vmatpush1.msra.mxu0 %v456
        %492 = vmatprep.subr.mxu0 0.0
        %493 = vmatpush1.msra.mxu0 %v457
        %494 = vmatprep.subr.mxu0 0.0
        %495 = vmatpush1.msra.mxu0 %v458
        %496 = vmatprep.subr.mxu0 0.0
        %497 = vmatpush1.msra.mxu0 %v459
        %498 = vmatprep.subr.mxu0 0.0
        %499 = vmatpush1.msra.mxu0 %v460
        %500 = vmatprep.subr.mxu0 0.0
        %501 = vmatpush1.msra.mxu0 0.0
        %502 = vmatprep.subr.mxu0 0.0
        %503 = vmatpush1.msra.mxu0 0.0
        %504 = vmatprep.subr.mxu0 0.0
        %505 = vmatpush1.msra.mxu0 0.0
        %506 = vmatprep.subr.mxu0 0.0
        %507 = vmatpush1.msra.mxu0 0.0
        %508 = vmatprep.subr.mxu0 0.0
        %509 = vmatpush1.msra.mxu0 0.0
        %510 = vmatprep.subr.mxu0 0.0
        %511 = vmatpush1.msra.mxu0 0.0
        %512 = vmatprep.subr.mxu0 0.0
        %513 = vmatpush1.msra.mxu0 0.0
        %514 = vmatprep.subr.mxu0 0.0
        %515 = vmatpush1.msra.mxu0 0.0
        %516 = vmatprep.subr.mxu0 0.0
        %517 = vmatpush1.msra.mxu0 0.0
        %518 = vmatprep.subr.mxu0 0.0
        %519 = vmatpush1.msra.mxu0 0.0
        %520 = vmatprep.subr.mxu0 0.0
        %521 = vmatpush1.msra.mxu0 0.0
        %522 = vmatprep.subr.mxu0 0.0
        %523 = vmatpush1.msra.mxu0 0.0
        %524 = vmatprep.subr.mxu0 0.0
        %525 = vmatpush1.msra.mxu0 0.0
        %526 = vmatprep.subr.mxu0 0.0
        %527 = vmatpush1.msra.mxu0 0.0
        %528 = vmatprep.subr.mxu0 0.0
        %529 = vmatpush1.msra.mxu0 0.0
        %530 = vmatprep.subr.mxu0 0.0
        %531 = vmatpush1.msra.mxu0 0.0
        %532 = vmatprep.mubr.f32.mxu0 0.0
        %533 = vmatmul.mubr.f32.gmra.mrb[0].mxu0 %v443
        %v534 = vpop.f32.mrb[0].mxu0
        %v535 = vadd.f32 %v466, %v534
        %v536 = vpop.f32.mrb[0].mxu0
        %537 = vmatprep.mubr.f32.mxu0 0.0
        %538 = vmatmul.mubr.f32.gmra.mrb[0].mxu0 %v444
        %v539 = vpop.f32.mrb[0].mxu0
        %v540 = vadd.f32 %v466, %v539
        %v541 = vpop.f32.mrb[0].mxu0
        %542 = vdwg.mxu0
        %v543 = vmax.f32 %v535, 0.0
        %v544 = vmax.f32 %v540, 0.0
        %v545 = vld [vmem:[#allocation8] sm:$0xff]
        %v546 = vld [vmem:[#allocation8 + $0x8] sm:$0xff]
        %v547 = vld [vmem:[#allocation8 + $0x10] sm:$0xff]
        %v548 = vld [vmem:[#allocation8 + $0x18] sm:$0xff]
        %v549 = vld [vmem:[#allocation8 + $0x20] sm:$0xff]
        %v550 = vld [vmem:[#allocation8 + $0x28] sm:$0xff]
        %v551 = vld [vmem:[#allocation8 + $0x30] sm:$0xff]
        %v552 = vld [vmem:[#allocation8 + $0x38] sm:$0xff]
        %v553 = vld [vmem:[#allocation8 + $0x40] sm:$0xff]
        %v554 = vld [vmem:[#allocation8 + $0x48] sm:$0xff]
        %v555 = vld [vmem:[#allocation8 + $0x50] sm:$0xff]
        %v556 = vld [vmem:[#allocation8 + $0x58] sm:$0xff]
        %v557 = vld [vmem:[#allocation8 + $0x60] sm:$0xff]
        %v558 = vld [vmem:[#allocation8 + $0x68] sm:$0xff]
        %v559 = vld [vmem:[#allocation8 + $0x70] sm:$0xff]
        %v560 = vld [vmem:[#allocation8 + $0x78] sm:$0xff]
        %v561 = vld [vmem:[%s6] sm:$0x1]
        %v563 = vlaneseq
        %v564 = vshrl.u32 %v563, 7
        %v565 = vsub.s32 0, %v564
        %v566 = vrot.slane %v561, %v565
        %568 = vmatprep.subr.mxu0 0.0
        %569 = vmatpush1.msra.mxu0 %v545
        %570 = vmatprep.subr.mxu0 0.0
        %571 = vmatpush1.msra.mxu0 %v546
        %572 = vmatprep.subr.mxu0 0.0
        %573 = vmatpush1.msra.mxu0 %v547
        %574 = vmatprep.subr.mxu0 0.0
        %575 = vmatpush1.msra.mxu0 %v548
        %576 = vmatprep.subr.mxu0 0.0
        %577 = vmatpush1.msra.mxu0 %v549
        %578 = vmatprep.subr.mxu0 0.0
        %579 = vmatpush1.msra.mxu0 %v550
        %580 = vmatprep.subr.mxu0 0.0
        %581 = vmatpush1.msra.mxu0 %v551
        %582 = vmatprep.subr.mxu0 0.0
        %583 = vmatpush1.msra.mxu0 %v552
        %584 = vmatprep.subr.mxu0 0.0
        %585 = vmatpush1.msra.mxu0 %v553
        %586 = vmatprep.subr.mxu0 0.0
        %587 = vmatpush1.msra.mxu0 %v554
        %588 = vmatprep.subr.mxu0 0.0
        %589 = vmatpush1.msra.mxu0 %v555
        %590 = vmatprep.subr.mxu0 0.0
        %591 = vmatpush1.msra.mxu0 %v556
        %592 = vmatprep.subr.mxu0 0.0
        %593 = vmatpush1.msra.mxu0 %v557
        %594 = vmatprep.subr.mxu0 0.0
        %595 = vmatpush1.msra.mxu0 %v558
        %596 = vmatprep.subr.mxu0 0.0
        %597 = vmatpush1.msra.mxu0 %v559
        %598 = vmatprep.subr.mxu0 0.0
        %599 = vmatpush1.msra.mxu0 %v560
        %600 = vmatprep.subr.mxu0 0.0
        %601 = vmatpush1.msra.mxu0 0.0
        %602 = vmatprep.subr.mxu0 0.0
        %603 = vmatpush1.msra.mxu0 0.0
        %604 = vmatprep.subr.mxu0 0.0
        %605 = vmatpush1.msra.mxu0 0.0
        %606 = vmatprep.subr.mxu0 0.0
        %607 = vmatpush1.msra.mxu0 0.0
        %608 = vmatprep.subr.mxu0 0.0
        %609 = vmatpush1.msra.mxu0 0.0
        %610 = vmatprep.subr.mxu0 0.0
        %611 = vmatpush1.msra.mxu0 0.0
        %612 = vmatprep.subr.mxu0 0.0
        %613 = vmatpush1.msra.mxu0 0.0
        %614 = vmatprep.subr.mxu0 0.0
        %615 = vmatpush1.msra.mxu0 0.0
        %616 = vmatprep.subr.mxu0 0.0
        %617 = vmatpush1.msra.mxu0 0.0
        %618 = vmatprep.subr.mxu0 0.0
        %619 = vmatpush1.msra.mxu0 0.0
        %620 = vmatprep.subr.mxu0 0.0
        %621 = vmatpush1.msra.mxu0 0.0
        %622 = vmatprep.subr.mxu0 0.0
        %623 = vmatpush1.msra.mxu0 0.0
        %624 = vmatprep.subr.mxu0 0.0
        %625 = vmatpush1.msra.mxu0 0.0
        %626 = vmatprep.subr.mxu0 0.0
        %627 = vmatpush1.msra.mxu0 0.0
        %628 = vmatprep.subr.mxu0 0.0
        %629 = vmatpush1.msra.mxu0 0.0
        %630 = vmatprep.subr.mxu0 0.0
        %631 = vmatpush1.msra.mxu0 0.0
        %632 = vmatprep.mubr.f32.mxu0 0.0
        %633 = vmatmul.mubr.f32.gmra.mrb[0].mxu0 %v543
        %v634 = vpop.f32.mrb[0].mxu0
        %v635 = vadd.f32 %v566, %v634
        %v636 = vpop.f32.mrb[0].mxu0
        %637 = vmatprep.mubr.f32.mxu0 0.0
        %638 = vmatmul.mubr.f32.gmra.mrb[0].mxu0 %v544
        %v639 = vpop.f32.mrb[0].mxu0
        %v640 = vadd.f32 %v566, %v639
        %v641 = vpop.f32.mrb[0].mxu0
        %642 = vdwg.mxu0
        %643 = vst [vmem:[%s340] sm:$0xff] %v635
        %644 = vst [vmem:[%s340 + $0x8] sm:$0xff] %v640
        %s645 = sand.u32 %s186, 1
        %s646 = scalar_lea.sflag [#allocation4], %s645
        %s647 = sand.u32 %s186, 1
        %s648 = smul.addr %s647, 16
        %s649 = scalar_lea.vmem [#allocation10], %s648
        // Predicated region
        $region65: #{tpu_custom_call.1} parent=47 // pred_check
          %p650 = pneg %p196
        $region66: #{tpu_custom_call.1} parent=47 // pred_check_branch
          %652 = sbr.rel (%p650) target = $region68
        $region67: #{tpu_custom_call.1} parent=47 // pred_region
          %s653 = smul.u32 2, %s26
          %s655 = ssub.s32 256, 256
          %656 = vsyncadd %s646, %s655
          %s657 = smul.addr %s653, 128
          %s658 = scalar_lea.hbm %s7, %s657
          %s659 = sshll.u32 %s649, 4
          %s660 = int_to_ptr.vmem [resolvable:$true] %s659
          %665 = dma.vmem_to_hbm [thread:$0]  %s660, 256, %s658, %s646, 128, 128, 8
        $region68: #{tpu_custom_call.1} parent=47 // pred_fallthru
          _
      $region48: #{tpu_custom_call.1} parent=5 // pred_fallthru
        _
      %p666 = scmp.le.s32.totalorder 2, %s21
      // Predicated region
      $region69: #{tpu_custom_call.1} parent=5 // pred_check
        %p667 = pneg %p666
      $region70: #{tpu_custom_call.1} parent=5 // pred_check_branch
        %669 = sbr.rel (%p667) target = $region72
      $region71: #{tpu_custom_call.1} parent=5 // pred_region
        %s670 = ssub.s32 %s21, 2
        // Predicated region
        $region73: #{tpu_custom_call.1} parent=71 // pred_check
          %p671 = pneg %p202
        $region74: #{tpu_custom_call.1} parent=71 // pred_check_branch
          %673 = sbr.rel (%p671) target = $region76
        $region75: #{tpu_custom_call.1} parent=71 // pred_region
          %s674 = sand.u32 %s187, 1
          %s675 = scalar_lea.sflag [#allocation4], %s674
          %s676 = sand.u32 %s187, 1
          %s677 = smul.addr %s676, 16
          %s678 = scalar_lea.vmem [#allocation10], %s677
          %679 = dma.done %s675, 256
        $region76: #{tpu_custom_call.1} parent=71 // pred_fallthru
          _
      $region72: #{tpu_custom_call.1} parent=5 // pred_fallthru
        _
    $region6: #{tpu_custom_call.1} parent=1 // loop_footer
      %s25 = sadd.s32 1, %s21
    $region7: #{tpu_custom_call.1} parent=1 // loop_footer_branch
      %20 = sbr.rel target = $region3
    $region8: #{tpu_custom_call.1} parent=1 // loop_exit
      _
    %680 = vsyncpa [#allocation3], 1
    %s681 = scalar_lea.sflag [#allocation3], 1
    %682 = vsyncpa %s681, 1
    %683 = vsyncpa [#allocation6], 1
    %684 = vsyncpa [#allocation9], 1
    %685 = vsyncpa [#allocation4], 1
    %s686 = scalar_lea.sflag [#allocation4], 1
    %687 = vsyncpa %s686, 1

</llo_original>
